<compile_context>
chip_gen: v7x
topology: tpu7x:2x2x1
jax: 0.10.0
libtpu: 0.0.40
codegen_flags: <defaults>
</compile_context>

<pallas_src>
import jax
import jax.numpy as jnp
from jax.experimental import pallas as pl
from jax.experimental.pallas import tpu as pltpu


def _gelu_exact(x):
    # nn.GELU() default = exact erf-based GELU (kept exact to match PyTorch).
    return 0.5 * x * (1.0 + jax.lax.erf(x * (1.0 / jnp.sqrt(2.0).astype(x.dtype))))


def _sdclip_kernel(x_ref, w1_ref, b1_ref, w2_ref, b2_ref, w3_ref, b3_ref, o_ref):
    """Fused LN -> 1x1-conv+GELU -> Linear+GELU -> Linear, channel-major."""
    # x_ref: (1, C_in, tm) NCHW slab -- channels on sublanes, tokens on lanes.
    x = x_ref[0].astype(jnp.float32)                          # (C_in, tm)

    # --- LayerNorm over channels (axis 0), eps=1e-5, biased variance, f32 ---
    # Affine (gamma, beta) is pre-folded into w1/b1 on the host.
    mean = jnp.mean(x, axis=0, keepdims=True)                 # (1, tm)
    xc = x - mean
    var = jnp.mean(xc * xc, axis=0, keepdims=True)
    xn = xc * jax.lax.rsqrt(var + 1e-5)                       # (C_in, tm)

    # --- sd_proj_layer: 1x1 Conv2d == W1 @ x (channel-major), then GELU ---
    h1 = jnp.dot(w1_ref[...], xn.astype(jnp.bfloat16),
                 preferred_element_type=jnp.float32) + b1_ref[...]
    h1 = _gelu_exact(h1)                                      # (Dq, tm) lane-dense

    # --- linear: Linear + GELU + Linear, still channel-major ---
    h2 = jnp.dot(w2_ref[...], h1.astype(jnp.bfloat16),
                 preferred_element_type=jnp.float32) + b2_ref[...]
    h2 = _gelu_exact(h2)                                      # (D, tm)
    h3 = jnp.dot(w3_ref[...], h2.astype(jnp.bfloat16),
                 preferred_element_type=jnp.float32) + b3_ref[...]   # (D, tm)

    # Single relayout at the very end: channel-major -> token-major (XLU).
    o_ref[0] = h3.T.astype(o_ref.dtype)                       # (tm, D)


def _pick_spatial_tile(hw, batch, target=2048):
    """Largest multiple of 128 dividing hw, <= target; keep total grid >= 2."""
    cands = [t for t in range(128, min(hw, target) + 1, 128) if hw % t == 0]
    if not cands:
        return hw                  # block dims may equal the full array dims
    if batch == 1:
        # v7x has 2 TensorCores sharded over the parallel grid axes; avoid a
        # 1-step grid when a smaller valid tile exists.
        two_step = [t for t in cands if hw // t >= 2]
        if two_step:
            cands = two_step
    return max(cands)


def sdclip_block_forward(x_list, params, *, select_layer=1, spatial_tile=2048,
                         out_dtype=jnp.bfloat16):
    """x_list mimics the module input: a list of NCHW tensors."""
    y = x_list[select_layer]                                  # (B, C_in, H, W) NCHW
    B, C_in, H, W = y.shape
    HW = H * W
    D = params["w3"].shape[0]                                 # out_channels
    Dq = params["w1"].shape[0]                                # out_channels // 4

    tm = _pick_spatial_tile(HW, B, spatial_tile)
    y = y.reshape(B, C_in, HW)                                # contiguous, free

    f32 = jnp.float32
    gamma = params["ln_gamma"].astype(f32).reshape(C_in)
    beta = params["ln_beta"].astype(f32).reshape(C_in)
    w1 = params["w1"].reshape(Dq, C_in).astype(f32)           # Conv2d 1x1 weight
    b1 = params["b1"].astype(f32).reshape(Dq)
    # Fold LN affine into the first matmul (do the algebra in f32, then cast):
    #   W1 @ (xn*gamma + beta) + b1 == (W1*gamma) @ xn + (W1 @ beta + b1)
    w1f = (w1 * gamma[None, :]).astype(jnp.bfloat16)          # (Dq, C_in)
    b1f = (w1 @ beta + b1).reshape(Dq, 1)                     # (Dq, 1) f32
    # Torch-native W @ X (channel-major): no weight transposes needed.
    w2 = params["w2"].astype(jnp.bfloat16)                    # (D, Dq)
    b2 = params["b2"].astype(f32).reshape(D, 1)
    w3 = params["w3"].astype(jnp.bfloat16)                    # (D, D)
    b3 = params["b3"].astype(f32).reshape(D, 1)

    # Grid-invariant blocks (weights/biases): Pallas skips re-DMA when the
    # block index does not change between grid steps.
    const = lambda shape: pl.BlockSpec(shape, lambda b, i: (0, 0))

    out = pl.pallas_call(
        _sdclip_kernel,
        out_shape=jax.ShapeDtypeStruct((B, HW, D), out_dtype),
        grid_spec=pltpu.PrefetchScalarGridSpec(
            num_scalar_prefetch=0,
            grid=(B, HW // tm),
            in_specs=[
                pl.BlockSpec((1, C_in, tm), lambda b, i: (b, 0, i)),  # NCHW slab
                const((Dq, C_in)),                             # w1 (LN folded in)
                const((Dq, 1)),                                # b1 (LN folded in)
                const((D, Dq)),                                # w2
                const((D, 1)),                                 # b2
                const((D, D)),                                 # w3
                const((D, 1)),                                 # b3
            ],
            out_specs=pl.BlockSpec((1, tm, D), lambda b, i: (b, i, 0)),
        ),
        compiler_params=pltpu.CompilerParams(
            dimension_semantics=("parallel", "parallel")),
    )(y, w1f, b1f, w2, b2, w3, b3)

    return out                                                # (B, H*W, out_channels)


def make_params(key, c_in, out_channels):
    Dq = out_channels // 4
    D = out_channels
    ks = jax.random.split(key, 8)
    f32 = jnp.float32
    return {
        # Non-trivial affine so the LN-fold path is actually exercised.
        "ln_gamma": 1.0 + 0.1 * jax.random.normal(ks[6], (c_in,), f32),
        "ln_beta": 0.05 * jax.random.normal(ks[7], (c_in,), f32),
        # Conv2d(C_in, D//4, 1): weight (D//4, C_in, 1, 1), bias (D//4,)
        "w1": jax.random.normal(ks[0], (Dq, c_in, 1, 1), f32) * 0.05,
        "b1": jax.random.normal(ks[1], (Dq,), f32) * 0.05,
        # Linear(D//4, D)
        "w2": jax.random.normal(ks[2], (D, Dq), f32) * 0.05,
        "b2": jax.random.normal(ks[3], (D,), f32) * 0.05,
        # Linear(D, D)
        "w3": jax.random.normal(ks[4], (D, D), f32) * 0.05,
        "b3": jax.random.normal(ks[5], (D,), f32) * 0.05,
    }


def _reference(x_list, params, select_layer=1):
    """Pure-JAX f32 reference mirroring the PyTorch forward exactly."""
    y = x_list[select_layer]                                  # (B, C, H, W)
    y = jnp.transpose(y, (0, 2, 3, 1))                        # NHWC
    mean = jnp.mean(y, axis=-1, keepdims=True)
    var = jnp.mean((y - mean) ** 2, axis=-1, keepdims=True)
    y = (y - mean) / jnp.sqrt(var + 1e-5)
    y = y * params["ln_gamma"] + params["ln_beta"]
    y = jnp.transpose(y, (0, 3, 1, 2))                        # NCHW
    w1 = params["w1"][:, :, 0, 0]                             # (Dq, C)
    y = jnp.einsum("bchw,oc->bohw", y, w1) + params["b1"][None, :, None, None]
    y = jax.nn.gelu(y, approximate=False)
    b, c, h, w = y.shape
    y = y.reshape(b, c, h * w).transpose(0, 2, 1)             # (B, HW, Dq)
    y = jax.nn.gelu(y @ params["w2"].T + params["b2"], approximate=False)
    y = y @ params["w3"].T + params["b3"]
    return y


if __name__ == "__main__":
    key = jax.random.PRNGKey(0)
    k_in0, k_in1, k_p = jax.random.split(key, 3)

    # Module config: in_channels=[4, 32], select_layer=1, out_channels=64
    in_channels = [4, 32]
    select_layer = 1
    out_channels = 64
    B, H, W = 2, 16, 16            # HW=256 -> spatial tile 256, grid (2, 1)

    x_list = [
        jax.random.normal(k_in0, (B, in_channels[0], H, W), jnp.float32),
        jax.random.normal(k_in1, (B, in_channels[1], H, W), jnp.float32),
    ]
    params = make_params(k_p, in_channels[select_layer], out_channels)

    out = sdclip_block_forward(x_list, params, select_layer=select_layer)
    out = jax.block_until_ready(out)

    ref = _reference(x_list, params, select_layer=select_layer)
    assert out.shape == (B, H * W, out_channels), out.shape
    # bf16 matmul operands + bf16 output (f32 accumulation) -> relaxed tolerance.
    out_f32 = out.astype(jnp.float32)
    max_err = float(jnp.max(jnp.abs(out_f32 - ref)))
    assert jnp.allclose(out_f32, ref, atol=2e-2, rtol=2e-2), max_err

    print("KERNEL_OK")
</pallas_src>

<mosaic_0001>
module attributes {stable_mosaic.version = 11 : i64} {
  func.func @_sdclip_kernel(%arg0: i32, %arg1: i32, %arg2: memref<1x32x256xf32, #tpu.memory_space<vmem>>, %arg3: memref<16x32xbf16, #tpu.memory_space<vmem>>, %arg4: memref<16x1xf32, #tpu.memory_space<vmem>>, %arg5: memref<64x16xbf16, #tpu.memory_space<vmem>>, %arg6: memref<64x1xf32, #tpu.memory_space<vmem>>, %arg7: memref<64x64xbf16, #tpu.memory_space<vmem>>, %arg8: memref<64x1xf32, #tpu.memory_space<vmem>>, %arg9: memref<1x256x64xbf16, #tpu.memory_space<vmem>>) attributes {dimension_semantics = [#tpu.dimension_semantics<parallel>, #tpu.dimension_semantics<parallel>], iteration_bounds = array<i64: 2, 1>, scalar_prefetch = 0 : i64, scratch_operands = 0 : i64, tpu.core_type = #tpu.core_type<tc>, window_params = [{transform_indices = @transform_0, window_bounds = array<i64: 1, 32, 256>}, {pipeline_mode = #tpu.pipeline_mode<synchronous>, transform_indices = @transform_1, window_bounds = array<i64: 16, 32>}, {pipeline_mode = #tpu.pipeline_mode<synchronous>, transform_indices = @transform_2, window_bounds = array<i64: 16, 1>}, {pipeline_mode = #tpu.pipeline_mode<synchronous>, transform_indices = @transform_3, window_bounds = array<i64: 64, 16>}, {pipeline_mode = #tpu.pipeline_mode<synchronous>, transform_indices = @transform_4, window_bounds = array<i64: 64, 1>}, {pipeline_mode = #tpu.pipeline_mode<synchronous>, transform_indices = @transform_5, window_bounds = array<i64: 64, 64>}, {pipeline_mode = #tpu.pipeline_mode<synchronous>, transform_indices = @transform_6, window_bounds = array<i64: 64, 1>}, {transform_indices = @transform_7, window_bounds = array<i64: 1, 256, 64>}]} {
    %c0 = arith.constant 0 : index
    %c0_0 = arith.constant 0 : index
    %c0_1 = arith.constant 0 : index
    %0 = vector.load %arg2[%c0, %c0_0, %c0_1] : memref<1x32x256xf32, #tpu.memory_space<vmem>>, vector<1x32x256xf32>
    %1 = vector.shape_cast %0 : vector<1x32x256xf32> to vector<32x256xf32>
    %cst = arith.constant dense<0.000000e+00> : vector<256xf32>
    %2 = vector.multi_reduction <add>, %1, %cst [0] : vector<32x256xf32> to vector<256xf32>
    %3 = vector.shape_cast %2 : vector<256xf32> to vector<1x256xf32>
    %cst_2 = arith.constant 3.200000e+01 : f32
    %4 = vector.broadcast %cst_2 : f32 to vector<1x256xf32>
    %5 = arith.divf %3, %4 : vector<1x256xf32>
    %6 = vector.broadcast %5 : vector<1x256xf32> to vector<32x256xf32>
    %7 = arith.subf %1, %6 : vector<32x256xf32>
    %8 = arith.mulf %7, %7 : vector<32x256xf32>
    %cst_3 = arith.constant dense<0.000000e+00> : vector<256xf32>
    %9 = vector.multi_reduction <add>, %8, %cst_3 [0] : vector<32x256xf32> to vector<256xf32>
    %10 = vector.shape_cast %9 : vector<256xf32> to vector<1x256xf32>
    %cst_4 = arith.constant 3.200000e+01 : f32
    %11 = vector.broadcast %cst_4 : f32 to vector<1x256xf32>
    %12 = arith.divf %10, %11 : vector<1x256xf32>
    %cst_5 = arith.constant 9.99999974E-6 : f32
    %13 = vector.broadcast %cst_5 : f32 to vector<1x256xf32>
    %14 = arith.addf %12, %13 : vector<1x256xf32>
    %15 = math.rsqrt %14 : vector<1x256xf32>
    %16 = vector.broadcast %15 : vector<1x256xf32> to vector<32x256xf32>
    %17 = arith.mulf %7, %16 : vector<32x256xf32>
    %c0_6 = arith.constant 0 : index
    %c0_7 = arith.constant 0 : index
    %18 = vector.load %arg3[%c0_6, %c0_7] : memref<16x32xbf16, #tpu.memory_space<vmem>>, vector<16x32xbf16>
    %19 = arith.truncf %17 : vector<32x256xf32> to vector<32x256xbf16>
    %cst_8 = arith.constant dense<0.000000e+00> : vector<16x256xf32>
    %20 = tpu.matmul %18, %19, %cst_8 {dimension_numbers = #tpu.dot_dimension_numbers<[1], [0], [0], [1], [0, 0, 1, 1], [], []>} : vector<16x32xbf16>, vector<32x256xbf16>, vector<16x256xf32> -> vector<16x256xf32>
    %c0_9 = arith.constant 0 : index
    %c0_10 = arith.constant 0 : index
    %21 = vector.load %arg4[%c0_9, %c0_10] : memref<16x1xf32, #tpu.memory_space<vmem>>, vector<16x1xf32>
    %22 = vector.broadcast %21 : vector<16x1xf32> to vector<16x256xf32>
    %23 = arith.addf %20, %22 : vector<16x256xf32>
    %cst_11 = arith.constant 5.000000e-01 : f32
    %24 = vector.broadcast %cst_11 : f32 to vector<16x256xf32>
    %25 = arith.mulf %24, %23 : vector<16x256xf32>
    %cst_12 = arith.constant 2.000000e+00 : f32
    %26 = math.sqrt %cst_12 : f32
    %cst_13 = arith.constant 1.000000e+00 : f32
    %27 = arith.divf %cst_13, %26 : f32
    %28 = vector.broadcast %27 : f32 to vector<16x256xf32>
    %29 = arith.mulf %23, %28 : vector<16x256xf32>
    %30 = math.erf %29 : vector<16x256xf32>
    %cst_14 = arith.constant 1.000000e+00 : f32
    %31 = vector.broadcast %cst_14 : f32 to vector<16x256xf32>
    %32 = arith.addf %31, %30 : vector<16x256xf32>
    %33 = arith.mulf %25, %32 : vector<16x256xf32>
    %c0_15 = arith.constant 0 : index
    %c0_16 = arith.constant 0 : index
    %34 = vector.load %arg5[%c0_15, %c0_16] : memref<64x16xbf16, #tpu.memory_space<vmem>>, vector<64x16xbf16>
    %35 = arith.truncf %33 : vector<16x256xf32> to vector<16x256xbf16>
    %cst_17 = arith.constant dense<0.000000e+00> : vector<64x256xf32>
    %36 = tpu.matmul %34, %35, %cst_17 {dimension_numbers = #tpu.dot_dimension_numbers<[1], [0], [0], [1], [0, 0, 1, 1], [], []>} : vector<64x16xbf16>, vector<16x256xbf16>, vector<64x256xf32> -> vector<64x256xf32>
    %c0_18 = arith.constant 0 : index
    %c0_19 = arith.constant 0 : index
    %37 = vector.load %arg6[%c0_18, %c0_19] : memref<64x1xf32, #tpu.memory_space<vmem>>, vector<64x1xf32>
    %38 = vector.broadcast %37 : vector<64x1xf32> to vector<64x256xf32>
    %39 = arith.addf %36, %38 : vector<64x256xf32>
    %cst_20 = arith.constant 5.000000e-01 : f32
    %40 = vector.broadcast %cst_20 : f32 to vector<64x256xf32>
    %41 = arith.mulf %40, %39 : vector<64x256xf32>
    %cst_21 = arith.constant 2.000000e+00 : f32
    %42 = math.sqrt %cst_21 : f32
    %cst_22 = arith.constant 1.000000e+00 : f32
    %43 = arith.divf %cst_22, %42 : f32
    %44 = vector.broadcast %43 : f32 to vector<64x256xf32>
    %45 = arith.mulf %39, %44 : vector<64x256xf32>
    %46 = math.erf %45 : vector<64x256xf32>
    %cst_23 = arith.constant 1.000000e+00 : f32
    %47 = vector.broadcast %cst_23 : f32 to vector<64x256xf32>
    %48 = arith.addf %47, %46 : vector<64x256xf32>
    %49 = arith.mulf %41, %48 : vector<64x256xf32>
    %c0_24 = arith.constant 0 : index
    %c0_25 = arith.constant 0 : index
    %50 = vector.load %arg7[%c0_24, %c0_25] : memref<64x64xbf16, #tpu.memory_space<vmem>>, vector<64x64xbf16>
    %51 = arith.truncf %49 : vector<64x256xf32> to vector<64x256xbf16>
    %cst_26 = arith.constant dense<0.000000e+00> : vector<64x256xf32>
    %52 = tpu.matmul %50, %51, %cst_26 {dimension_numbers = #tpu.dot_dimension_numbers<[1], [0], [0], [1], [0, 0, 1, 1], [], []>} : vector<64x64xbf16>, vector<64x256xbf16>, vector<64x256xf32> -> vector<64x256xf32>
    %c0_27 = arith.constant 0 : index
    %c0_28 = arith.constant 0 : index
    %53 = vector.load %arg8[%c0_27, %c0_28] : memref<64x1xf32, #tpu.memory_space<vmem>>, vector<64x1xf32>
    %54 = vector.broadcast %53 : vector<64x1xf32> to vector<64x256xf32>
    %55 = arith.addf %52, %54 : vector<64x256xf32>
    %56 = tpu.transpose %55, [1, 0] : vector<64x256xf32> -> vector<256x64xf32>
    %57 = arith.truncf %56 : vector<256x64xf32> to vector<256x64xbf16>
    %c0_29 = arith.constant 0 : index
    %c0_30 = arith.constant 0 : index
    %c0_31 = arith.constant 0 : index
    %58 = vector.load %arg9[%c0_29, %c0_30, %c0_31] : memref<1x256x64xbf16, #tpu.memory_space<vmem>>, vector<1x256x64xbf16>
    %59 = vector.shape_cast %58 : vector<1x256x64xbf16> to vector<256x64xbf16>
    %60 = vector.shape_cast %57 : vector<256x64xbf16> to vector<1x256x64xbf16>
    tpu.vector_store %arg9[%c0_29, %c0_30, %c0_31], %60 {strides = array<i32>} : memref<1x256x64xbf16, #tpu.memory_space<vmem>>, vector<1x256x64xbf16>,
    return
  }
  func.func @transform_0(%arg0: i32, %arg1: i32) -> (i32, i32, i32) {
    %c0_i32 = arith.constant 0 : i32
    %c0_i32_0 = arith.constant 0 : i32
    return %arg0, %c0_i32, %arg1 : i32, i32, i32
  }
  func.func @transform_1(%arg0: i32, %arg1: i32) -> (i32, i32) {
    %c0_i32 = arith.constant 0 : i32
    %c0_i32_0 = arith.constant 0 : i32
    %c0_i32_1 = arith.constant 0 : i32
    return %c0_i32, %c0_i32_0 : i32, i32
  }
  func.func @transform_2(%arg0: i32, %arg1: i32) -> (i32, i32) {
    %c0_i32 = arith.constant 0 : i32
    %c0_i32_0 = arith.constant 0 : i32
    %c0_i32_1 = arith.constant 0 : i32
    return %c0_i32, %c0_i32_0 : i32, i32
  }
  func.func @transform_3(%arg0: i32, %arg1: i32) -> (i32, i32) {
    %c0_i32 = arith.constant 0 : i32
    %c0_i32_0 = arith.constant 0 : i32
    %c0_i32_1 = arith.constant 0 : i32
    return %c0_i32, %c0_i32_0 : i32, i32
  }
  func.func @transform_4(%arg0: i32, %arg1: i32) -> (i32, i32) {
    %c0_i32 = arith.constant 0 : i32
    %c0_i32_0 = arith.constant 0 : i32
    %c0_i32_1 = arith.constant 0 : i32
    return %c0_i32, %c0_i32_0 : i32, i32
  }
  func.func @transform_5(%arg0: i32, %arg1: i32) -> (i32, i32) {
    %c0_i32 = arith.constant 0 : i32
    %c0_i32_0 = arith.constant 0 : i32
    %c0_i32_1 = arith.constant 0 : i32
    return %c0_i32, %c0_i32_0 : i32, i32
  }
  func.func @transform_6(%arg0: i32, %arg1: i32) -> (i32, i32) {
    %c0_i32 = arith.constant 0 : i32
    %c0_i32_0 = arith.constant 0 : i32
    %c0_i32_1 = arith.constant 0 : i32
    return %c0_i32, %c0_i32_0 : i32, i32
  }
  func.func @transform_7(%arg0: i32, %arg1: i32) -> (i32, i32, i32) {
    %c0_i32 = arith.constant 0 : i32
    %c0_i32_0 = arith.constant 0 : i32
    return %arg0, %arg1, %c0_i32 : i32, i32, i32
  }
}

</mosaic_0001>

<llo_original>
// kernel: tpu_custom_call.1
$region0: #{tpu_custom_call.1}
  #allocation0 [shape = 'u32[]', space=smem, size = 0x4, offset = 0x4, fixed_abs, tag = 'smem constant byte address 0x4 - core index']
  #allocation1 [shape = 'u32[144,128]{1,0:T(1,128)}', space=vmem, size = 0x12000, scoped, tag = 'internal scratch']
  %s0 = inlined_call_operand.vmem [shape: f32[2,32,256], index: 0, kind: input, shape index: {}]
  %s1 = inlined_call_operand.vmem [shape: bf16[16,32], index: 1, kind: input, shape index: {}]
  %s2 = inlined_call_operand.vmem [shape: f32[16,1], index: 2, kind: input, shape index: {}]
  %s3 = inlined_call_operand.vmem [shape: bf16[64,16], index: 3, kind: input, shape index: {}]
  %s4 = inlined_call_operand.vmem [shape: f32[64,1], index: 4, kind: input, shape index: {}]
  %s5 = inlined_call_operand.vmem [shape: bf16[64,64], index: 5, kind: input, shape index: {}]
  %s6 = inlined_call_operand.vmem [shape: f32[64,1], index: 6, kind: input, shape index: {}]
  %s7 = inlined_call_operand.vmem [shape: bf16[2,256,64], index: 7, kind: output, shape index: {}]
  %s8 = sld [smem:[#allocation0]]
  $region61: #{tpu_custom_call.1} parent=0
    _
  %s10 = ssub.s32 1, %s8
  %s11 = scalar_select 0, %s10, %s8
  loop: start=0, step=1, limit=4
  $region2: #{tpu_custom_call.1} parent=0 // loop_pre_header
    _
  $region3: #{tpu_custom_call.1} parent=0 // loop_header
    %s13 = sphi 0, %s17
    %p14 = scmp.ge.s32.totalorder %s13, 4
    %s20 = sphi 0, %s32
    %s21 = sphi 0, %s28
    %s22 = sphi 0, %s20
    %s23 = sphi 0, %s21
    %s24 = sphi 0, %s22
    %s25 = sphi 0, %s23
    %s37 = sphi 0, %s39
    %s40 = sphi 0, %s37
    %s41 = sphi 0, %s40
    %s57 = sphi 0, %s41
    %s61 = sphi 0, %s61
    %s63 = sphi 0, %s61
    %s64 = sphi 0, %s63
    %s78 = sphi 0, %s64
    %s82 = sphi 0, %s82
    %s84 = sphi 0, %s82
    %s85 = sphi 0, %s84
    %s99 = sphi 0, %s85
    %s103 = sphi 0, %s103
    %s105 = sphi 0, %s103
    %s106 = sphi 0, %s105
    %s120 = sphi 0, %s106
    %s124 = sphi 0, %s124
    %s126 = sphi 0, %s124
    %s127 = sphi 0, %s126
    %s141 = sphi 0, %s127
    %s145 = sphi 0, %s145
    %s147 = sphi 0, %s145
    %s148 = sphi 0, %s147
    %s162 = sphi 0, %s148
    %s166 = sphi 0, %s166
    %s168 = sphi 0, %s166
    %s169 = sphi 0, %s168
    %s183 = sphi 0, %s169
    %s191 = sphi 0, %s193
    %s194 = sphi 0, %s191
    %s195 = sphi 0, %s194
    %s211 = sphi 0, %s195
  $region4: #{tpu_custom_call.1} parent=0 // loop_header_branch
    %16 = sbr.rel (%p14) target = $region8
  $region5: #{tpu_custom_call.1} parent=0 // loop_body
    %s18 = ssub.s32 %s13, 1
    %s19 = ssub.s32 %s13, 2
    %s26 = sadd.s32 1, %s21
    %p27 = scmp.ge.s32.totalorder %s26, 1
    %s28 = scalar_select %p27, 0, %s26
    %s29 = sadd.s32 1, %s20
    %s30 = scalar_select %p27, %s29, %s20
    %p31 = scmp.ge.s32.totalorder %s30, 2
    %s32 = scalar_select %p31, 0, %s30
    %s33 = ssub.s32 %s20, %s32
    %s34 = ssub.s32 %s21, %s28
    %s35 = sor.u32 %s33, %s34
    %p36 = scmp.eq.s32.totalorder %s35, 0
    %s38 = sadd.s32 %s37, 1
    %s39 = scalar_select %p36, %s37, %s38
    %p42 = pneg %p36
    %p43 = scmp.eq.s32.totalorder %s13, 1
    %p44 = por %p42, %p43
    %p45 = scmp.ne.s32.totalorder %s37, %s40
    %p46 = scmp.eq.s32.totalorder %s13, 0
    %p47 = por %p45, %p46
    %p48 = scmp.ne.s32.totalorder %s37, %s40
    %p49 = scmp.eq.s32.totalorder %s18, 1
    %p50 = por %p48, %p49
    %p51 = scmp.ne.s32.totalorder %s40, %s41
    %p52 = scmp.eq.s32.totalorder %s18, 0
    %p53 = por %p51, %p52
    %p54 = scmp.ne.s32.totalorder %s40, %s41
    %p55 = scmp.eq.s32.totalorder %s19, 1
    %p56 = por %p54, %p55
    %p58 = scmp.ne.s32.totalorder %s41, %s57
    %p59 = scmp.eq.s32.totalorder %s19, 0
    %p60 = por %p58, %p59
    %s62 = sadd.s32 %s61, 1
    %p65 = scmp.eq.s32.totalorder %s13, 1
    %p66 = scmp.ne.s32.totalorder %s61, %s63
    %p67 = scmp.eq.s32.totalorder %s13, 0
    %p68 = por %p66, %p67
    %p69 = scmp.ne.s32.totalorder %s61, %s63
    %p70 = scmp.eq.s32.totalorder %s18, 1
    %p71 = por %p69, %p70
    %p72 = scmp.ne.s32.totalorder %s63, %s64
    %p73 = scmp.eq.s32.totalorder %s18, 0
    %p74 = por %p72, %p73
    %p75 = scmp.ne.s32.totalorder %s63, %s64
    %p76 = scmp.eq.s32.totalorder %s19, 1
    %p77 = por %p75, %p76
    %p79 = scmp.ne.s32.totalorder %s64, %s78
    %p80 = scmp.eq.s32.totalorder %s19, 0
    %p81 = por %p79, %p80
    %s83 = sadd.s32 %s82, 1
    %p86 = scmp.eq.s32.totalorder %s13, 1
    %p87 = scmp.ne.s32.totalorder %s82, %s84
    %p88 = scmp.eq.s32.totalorder %s13, 0
    %p89 = por %p87, %p88
    %p90 = scmp.ne.s32.totalorder %s82, %s84
    %p91 = scmp.eq.s32.totalorder %s18, 1
    %p92 = por %p90, %p91
    %p93 = scmp.ne.s32.totalorder %s84, %s85
    %p94 = scmp.eq.s32.totalorder %s18, 0
    %p95 = por %p93, %p94
    %p96 = scmp.ne.s32.totalorder %s84, %s85
    %p97 = scmp.eq.s32.totalorder %s19, 1
    %p98 = por %p96, %p97
    %p100 = scmp.ne.s32.totalorder %s85, %s99
    %p101 = scmp.eq.s32.totalorder %s19, 0
    %p102 = por %p100, %p101
    %s104 = sadd.s32 %s103, 1
    %p107 = scmp.eq.s32.totalorder %s13, 1
    %p108 = scmp.ne.s32.totalorder %s103, %s105
    %p109 = scmp.eq.s32.totalorder %s13, 0
    %p110 = por %p108, %p109
    %p111 = scmp.ne.s32.totalorder %s103, %s105
    %p112 = scmp.eq.s32.totalorder %s18, 1
    %p113 = por %p111, %p112
    %p114 = scmp.ne.s32.totalorder %s105, %s106
    %p115 = scmp.eq.s32.totalorder %s18, 0
    %p116 = por %p114, %p115
    %p117 = scmp.ne.s32.totalorder %s105, %s106
    %p118 = scmp.eq.s32.totalorder %s19, 1
    %p119 = por %p117, %p118
    %p121 = scmp.ne.s32.totalorder %s106, %s120
    %p122 = scmp.eq.s32.totalorder %s19, 0
    %p123 = por %p121, %p122
    %s125 = sadd.s32 %s124, 1
    %p128 = scmp.eq.s32.totalorder %s13, 1
    %p129 = scmp.ne.s32.totalorder %s124, %s126
    %p130 = scmp.eq.s32.totalorder %s13, 0
    %p131 = por %p129, %p130
    %p132 = scmp.ne.s32.totalorder %s124, %s126
    %p133 = scmp.eq.s32.totalorder %s18, 1
    %p134 = por %p132, %p133
    %p135 = scmp.ne.s32.totalorder %s126, %s127
    %p136 = scmp.eq.s32.totalorder %s18, 0
    %p137 = por %p135, %p136
    %p138 = scmp.ne.s32.totalorder %s126, %s127
    %p139 = scmp.eq.s32.totalorder %s19, 1
    %p140 = por %p138, %p139
    %p142 = scmp.ne.s32.totalorder %s127, %s141
    %p143 = scmp.eq.s32.totalorder %s19, 0
    %p144 = por %p142, %p143
    %s146 = sadd.s32 %s145, 1
    %p149 = scmp.eq.s32.totalorder %s13, 1
    %p150 = scmp.ne.s32.totalorder %s145, %s147
    %p151 = scmp.eq.s32.totalorder %s13, 0
    %p152 = por %p150, %p151
    %p153 = scmp.ne.s32.totalorder %s145, %s147
    %p154 = scmp.eq.s32.totalorder %s18, 1
    %p155 = por %p153, %p154
    %p156 = scmp.ne.s32.totalorder %s147, %s148
    %p157 = scmp.eq.s32.totalorder %s18, 0
    %p158 = por %p156, %p157
    %p159 = scmp.ne.s32.totalorder %s147, %s148
    %p160 = scmp.eq.s32.totalorder %s19, 1
    %p161 = por %p159, %p160
    %p163 = scmp.ne.s32.totalorder %s148, %s162
    %p164 = scmp.eq.s32.totalorder %s19, 0
    %p165 = por %p163, %p164
    %s167 = sadd.s32 %s166, 1
    %p170 = scmp.eq.s32.totalorder %s13, 1
    %p171 = scmp.ne.s32.totalorder %s166, %s168
    %p172 = scmp.eq.s32.totalorder %s13, 0
    %p173 = por %p171, %p172
    %p174 = scmp.ne.s32.totalorder %s166, %s168
    %p175 = scmp.eq.s32.totalorder %s18, 1
    %p176 = por %p174, %p175
    %p177 = scmp.ne.s32.totalorder %s168, %s169
    %p178 = scmp.eq.s32.totalorder %s18, 0
    %p179 = por %p177, %p178
    %p180 = scmp.ne.s32.totalorder %s168, %s169
    %p181 = scmp.eq.s32.totalorder %s19, 1
    %p182 = por %p180, %p181
    %p184 = scmp.ne.s32.totalorder %s169, %s183
    %p185 = scmp.eq.s32.totalorder %s19, 0
    %p186 = por %p184, %p185
    %s187 = ssub.s32 %s20, %s32
    %s188 = ssub.s32 %s21, %s28
    %s189 = sor.u32 %s187, %s188
    %p190 = scmp.eq.s32.totalorder %s189, 0
    %s192 = sadd.s32 %s191, 1
    %s193 = scalar_select %p190, %s191, %s192
    %p196 = pneg %p190
    %p197 = scmp.eq.s32.totalorder %s13, 1
    %p198 = por %p196, %p197
    %p199 = scmp.ne.s32.totalorder %s191, %s194
    %p200 = scmp.eq.s32.totalorder %s13, 0
    %p201 = por %p199, %p200
    %p202 = scmp.ne.s32.totalorder %s191, %s194
    %p203 = scmp.eq.s32.totalorder %s18, 1
    %p204 = por %p202, %p203
    %p205 = scmp.ne.s32.totalorder %s194, %s195
    %p206 = scmp.eq.s32.totalorder %s18, 0
    %p207 = por %p205, %p206
    %p208 = scmp.ne.s32.totalorder %s194, %s195
    %p209 = scmp.eq.s32.totalorder %s19, 1
    %p210 = por %p208, %p209
    %p212 = scmp.ne.s32.totalorder %s195, %s211
    %p213 = scmp.eq.s32.totalorder %s19, 0
    %p214 = por %p212, %p213
    %p215 = scmp.le.s32.totalorder 1, %s13
    %p216 = scmp.lt.s32.totalorder %s13, 3
    %p217 = pnand %p215, %p216
    %p218 = pneg %p217
    // Predicated region
    $region9: #{tpu_custom_call.1} parent=5 // pred_check
      _
    $region10: #{tpu_custom_call.1} parent=5 // pred_check_branch
      %220 = sbr.rel (%p217) target = $region12
    $region11: #{tpu_custom_call.1} parent=5 // pred_region
      %s221 = ssub.s32 %s13, 1
      // Predicated region
      $region13: #{tpu_custom_call.1} parent=11 // pred_check
        %p222 = pneg %p74
      $region14: #{tpu_custom_call.1} parent=11 // pred_check_branch
        %224 = sbr.rel (%p222) target = $region16
      $region15: #{tpu_custom_call.1} parent=11 // pred_region
        _
      $region16: #{tpu_custom_call.1} parent=11 // pred_fallthru
        _
      // Predicated region
      $region17: #{tpu_custom_call.1} parent=11 // pred_check
        %p225 = pneg %p95
      $region18: #{tpu_custom_call.1} parent=11 // pred_check_branch
        %227 = sbr.rel (%p225) target = $region20
      $region19: #{tpu_custom_call.1} parent=11 // pred_region
        _
      $region20: #{tpu_custom_call.1} parent=11 // pred_fallthru
        _
      // Predicated region
      $region21: #{tpu_custom_call.1} parent=11 // pred_check
        %p228 = pneg %p116
      $region22: #{tpu_custom_call.1} parent=11 // pred_check_branch
        %230 = sbr.rel (%p228) target = $region24
      $region23: #{tpu_custom_call.1} parent=11 // pred_region
        _
      $region24: #{tpu_custom_call.1} parent=11 // pred_fallthru
        _
      // Predicated region
      $region25: #{tpu_custom_call.1} parent=11 // pred_check
        %p231 = pneg %p137
      $region26: #{tpu_custom_call.1} parent=11 // pred_check_branch
        %233 = sbr.rel (%p231) target = $region28
      $region27: #{tpu_custom_call.1} parent=11 // pred_region
        _
      $region28: #{tpu_custom_call.1} parent=11 // pred_fallthru
        _
      // Predicated region
      $region29: #{tpu_custom_call.1} parent=11 // pred_check
        %p234 = pneg %p158
      $region30: #{tpu_custom_call.1} parent=11 // pred_check_branch
        %236 = sbr.rel (%p234) target = $region32
      $region31: #{tpu_custom_call.1} parent=11 // pred_region
        _
      $region32: #{tpu_custom_call.1} parent=11 // pred_fallthru
        _
      // Predicated region
      $region33: #{tpu_custom_call.1} parent=11 // pred_check
        %p237 = pneg %p179
      $region34: #{tpu_custom_call.1} parent=11 // pred_check_branch
        %239 = sbr.rel (%p237) target = $region36
      $region35: #{tpu_custom_call.1} parent=11 // pred_region
        _
      $region36: #{tpu_custom_call.1} parent=11 // pred_fallthru
        _
    $region12: #{tpu_custom_call.1} parent=5 // pred_fallthru
      _
    %p240 = scmp.lt.s32.totalorder %s13, 2
    // Predicated region
    $region37: #{tpu_custom_call.1} parent=5 // pred_check
      %p241 = pneg %p240
    $region38: #{tpu_custom_call.1} parent=5 // pred_check_branch
      %243 = sbr.rel (%p241) target = $region40
    $region39: #{tpu_custom_call.1} parent=5 // pred_region
      // Predicated region
      $region41: #{tpu_custom_call.1} parent=39 // pred_check
        %p244 = pneg %p47
      $region42: #{tpu_custom_call.1} parent=39 // pred_check_branch
        %246 = sbr.rel (%p244) target = $region44
      $region43: #{tpu_custom_call.1} parent=39 // pred_region
        %s247 = smul.u32 2, %s21
        %p248 = scmp.lt.s32.totalorder %s20, 1
        %s249 = scalar_select %p248, %s20, 1
        %p250 = scmp.lt.s32.totalorder %s247, 1
        %s251 = scalar_select %p250, %s247, 1
        %s252 = smul.addr %s249, 8
        %s253 = sadd.s32 %s251, %s252
        %s254 = smul.addr %s253, 8
        %s255 = scalar_lea.vmem %s0, %s254
        %s256 = smul.u32 2, %s21
      $region44: #{tpu_custom_call.1} parent=39 // pred_fallthru
        _
    $region40: #{tpu_custom_call.1} parent=5 // pred_fallthru
      _
    %p257 = scmp.le.s32.totalorder 1, %s13
    %p258 = scmp.lt.s32.totalorder %s13, 3
    %p259 = pnand %p257, %p258
    %p260 = pneg %p259
    // Predicated region
    $region45: #{tpu_custom_call.1} parent=5 // pred_check
      _
    $region46: #{tpu_custom_call.1} parent=5 // pred_check_branch
      %262 = sbr.rel (%p259) target = $region48
    $region47: #{tpu_custom_call.1} parent=5 // pred_region
      %s263 = ssub.s32 %s13, 1
      %s264 = smul.u32 2, %s23
      %p265 = scmp.lt.s32.totalorder %s22, 1
      %s266 = scalar_select %p265, %s22, 1
      %p267 = scmp.lt.s32.totalorder %s264, 1
      %s268 = scalar_select %p267, %s264, 1
      %s269 = smul.addr %s266, 8
      %s270 = sadd.s32 %s268, %s269
      %s271 = smul.addr %s270, 8
      %s272 = scalar_lea.vmem %s0, %s271
      %p273 = pneg %p53
      %p274 = pneg %p50
      %p275 = pneg %p74
      %p276 = pneg %p71
      %p277 = pneg %p95
      %p278 = pneg %p92
      %p279 = pneg %p116
      %p280 = pneg %p113
      %p281 = pneg %p137
      %p282 = pneg %p134
      %p283 = pneg %p158
      %p284 = pneg %p155
      %p285 = pneg %p179
      %p286 = pneg %p176
      %p287 = pneg %p207
      %p288 = pneg %p204
      %s289 = smul.u32 32, %s23
      %p290 = scmp.lt.s32.totalorder %s22, 1
      %s291 = scalar_select %p290, %s22, 1
      %p292 = scmp.lt.s32.totalorder %s289, 31
      %s293 = scalar_select %p292, %s289, 31
      %s294 = smul.addr %s291, 32
      %s295 = sadd.s32 %s293, %s294
      %s296 = smul.addr %s295, 4
      %s297 = scalar_lea.vmem %s7, %s296
      %s298 = smul.u32 2, %s23
      %p299 = scmp.lt.s32.totalorder %s22, 1
      %s300 = scalar_select %p299, %s22, 1
      %p301 = scmp.lt.s32.totalorder %s298, 1
      %s302 = scalar_select %p301, %s298, 1
      %s303 = smul.addr %s300, 8
      %s304 = sadd.s32 %s302, %s303
      %s305 = smul.addr %s304, 8
      %s306 = scalar_lea.vmem %s0, %s305
      %s307 = smul.u32 2, %s23
      %s308 = smul.u32 32, %s23
      %p309 = scmp.lt.s32.totalorder %s22, 1
      %s310 = scalar_select %p309, %s22, 1
      %p311 = scmp.lt.s32.totalorder %s308, 31
      %s312 = scalar_select %p311, %s308, 31
      %s313 = smul.addr %s310, 32
      %s314 = sadd.s32 %s312, %s313
      %s315 = smul.addr %s314, 4
      %s316 = scalar_lea.vmem %s7, %s315
      %s317 = smul.u32 32, %s23
      %v319 = vld [vmem:[%s306] sm:$0xff]
      %v320 = vld [vmem:[%s306 + $0x8] sm:$0xff]
      %v321 = vld [vmem:[%s306 + $0x10] sm:$0xff]
      %v322 = vld [vmem:[%s306 + $0x18] sm:$0xff]
      %v323 = vld [vmem:[%s306 + $0x20] sm:$0xff]
      %v324 = vld [vmem:[%s306 + $0x28] sm:$0xff]
      %v325 = vld [vmem:[%s306 + $0x30] sm:$0xff]
      %v326 = vld [vmem:[%s306 + $0x38] sm:$0xff]
      %v327 = vadd.f32 %v319, %v321
      %v328 = vadd.f32 %v327, %v323
      %v329 = vadd.f32 %v328, %v325
      %v330 = vrot.slane %v329, 4
      %v331 = vadd.f32 %v329, %v330
      %v332 = vrot.slane %v331, 2
      %v333 = vadd.f32 %v331, %v332
      %v334 = vrot.slane %v333, 1
      %v335 = vadd.f32 %v333, %v334
      %v336 = vadd.f32 %v320, %v322
      %v337 = vadd.f32 %v336, %v324
      %v338 = vadd.f32 %v337, %v326
      %v339 = vrot.slane %v338, 4
      %v340 = vadd.f32 %v338, %v339
      %v341 = vrot.slane %v340, 2
      %v342 = vadd.f32 %v340, %v341
      %v343 = vrot.slane %v342, 1
      %v344 = vadd.f32 %v342, %v343
      %v345 = vrcp.pop 32.0
      %v346 = vmul.f32 %v335, %v345
      %v347 = vmul.f32 %v344, %v345
      %v348 = vsub.f32 %v319, %v346
      %v349 = vsub.f32 %v320, %v347
      %v350 = vsub.f32 %v321, %v346
      %v351 = vsub.f32 %v322, %v347
      %v352 = vsub.f32 %v323, %v346
      %v353 = vsub.f32 %v324, %v347
      %v354 = vsub.f32 %v325, %v346
      %v355 = vsub.f32 %v326, %v347
      %v356 = vmul.f32 %v348, %v348
      %v357 = vmul.f32 %v349, %v349
      %v358 = vmul.f32 %v350, %v350
      %v359 = vmul.f32 %v351, %v351
      %v360 = vmul.f32 %v352, %v352
      %v361 = vmul.f32 %v353, %v353
      %v362 = vmul.f32 %v354, %v354
      %v363 = vmul.f32 %v355, %v355
      %v364 = vadd.f32 %v356, %v358
      %v365 = vadd.f32 %v364, %v360
      %v366 = vadd.f32 %v365, %v362
      %v367 = vrot.slane %v366, 4
      %v368 = vadd.f32 %v366, %v367
      %v369 = vrot.slane %v368, 2
      %v370 = vadd.f32 %v368, %v369
      %v371 = vrot.slane %v370, 1
      %v372 = vadd.f32 %v370, %v371
      %v373 = vadd.f32 %v357, %v359
      %v374 = vadd.f32 %v373, %v361
      %v375 = vadd.f32 %v374, %v363
      %v376 = vrot.slane %v375, 4
      %v377 = vadd.f32 %v375, %v376
      %v378 = vrot.slane %v377, 2
      %v379 = vadd.f32 %v377, %v378
      %v380 = vrot.slane %v379, 1
      %v381 = vadd.f32 %v379, %v380
      %v382 = vmul.f32 %v372, %v345
      %v383 = vmul.f32 %v381, %v345
      %v384 = vadd.f32 %v382, 1e-05
      %v385 = vadd.f32 %v383, 1e-05
      %v386 = vrsqrt.pop %v384
      %v387 = vrsqrt.pop %v385
      %v388 = vmul.f32 %v348, %v386
      %v389 = vmul.f32 %v349, %v387
      %v390 = vmul.f32 %v350, %v386
      %v391 = vmul.f32 %v351, %v387
      %v392 = vmul.f32 %v352, %v386
      %v393 = vmul.f32 %v353, %v387
      %v394 = vmul.f32 %v354, %v386
      %v395 = vmul.f32 %v355, %v387
      %v396 = vld [vmem:[%s1] sm:$0xf]
      %v397 = vld [vmem:[%s1 + $0x4] sm:$0xf]
      %v398 = vpack.c.bf16 %v390, %v388
      %v399 = vpack.c.bf16 %v391, %v389
      %v400 = vpack.c.bf16 %v394, %v392
      %v401 = vpack.c.bf16 %v395, %v393
      %v402 = vld [vmem:[%s2] sm:$0xff]
      %v403 = vld [vmem:[%s2 + $0x8] sm:$0xff]
      %405 = vset.pattern.permute.xlu0 0
      %406 = vperm.xlu0 %405, %v402
      %v407 = vpop.permute.xlu0 %406
      %410 = vset.pattern.permute.xlu0 0
      %411 = vperm.xlu0 %410, %v403
      %v412 = vpop.permute.xlu0 %411
      %v416 = vunpack.c.l.b16 %v396
      %v417 = vunpack.c.l.b16 %v397
      %v418 = vpack.c.b16 %v417, %v416
      %vm419 = vcmask 261120
      %v421 = vsel %vm419, %v418, 0
      %423 = vmatprep.subr.bf16.mxu0 %v399
      %424 = vmatpush1.bf16.msra.mxu0 %v398
      %425 = vmatprep.subr.bf16.mxu0 %v401
      %426 = vmatpush1.bf16.msra.mxu0 %v400
      %427 = vmatprep.subr.bf16.mxu0 0
      %428 = vmatpush1.bf16.msra.mxu0 0
      %429 = vmatprep.subr.bf16.mxu0 0
      %430 = vmatpush1.bf16.msra.mxu0 0
      %431 = vmatprep.subr.bf16.mxu0 0
      %432 = vmatpush1.bf16.msra.mxu0 0
      %433 = vmatprep.subr.bf16.mxu0 0
      %434 = vmatpush1.bf16.msra.mxu0 0
      %435 = vmatprep.subr.bf16.mxu0 0
      %436 = vmatpush1.bf16.msra.mxu0 0
      %437 = vmatprep.subr.bf16.mxu0 0
      %438 = vmatpush1.bf16.msra.mxu0 0
      %439 = vmatprep.subr.bf16.mxu0 0
      %440 = vmatpush1.bf16.msra.mxu0 0
      %441 = vmatprep.subr.bf16.mxu0 0
      %442 = vmatpush1.bf16.msra.mxu0 0
      %443 = vmatprep.subr.bf16.mxu0 0
      %444 = vmatpush1.bf16.msra.mxu0 0
      %445 = vmatprep.subr.bf16.mxu0 0
      %446 = vmatpush1.bf16.msra.mxu0 0
      %447 = vmatprep.subr.bf16.mxu0 0
      %448 = vmatpush1.bf16.msra.mxu0 0
      %449 = vmatprep.subr.bf16.mxu0 0
      %450 = vmatpush1.bf16.msra.mxu0 0
      %451 = vmatprep.subr.bf16.mxu0 0
      %452 = vmatpush1.bf16.msra.mxu0 0
      %453 = vmatprep.subr.bf16.mxu0 0
      %454 = vmatpush1.bf16.msra.mxu0 0
      %455 = vmatprep.mubr.bf16.mxu0 0
      %456 = vmatmul.mubr.bf16.gmra.mrb[0].mxu0 %v421
      %v457 = vpop.f32.mrb[0].mxu0
      %v458 = vadd.f32 %v407, %v457
      %v459 = vpop.f32.mrb[0].mxu0
      %v460 = vadd.f32 %v407, %v459
      %v461 = vpop.f32.mrb[0].mxu0
      %v462 = vadd.f32 %v412, %v461
      %v463 = vpop.f32.mrb[0].mxu0
      %v464 = vadd.f32 %v412, %v463
      %465 = vdwg.mxu0
      %v466 = vmul.f32 %v458, 0.5
      %v467 = vmul.f32 %v460, 0.5
      %v468 = vmul.f32 %v462, 0.5
      %v469 = vmul.f32 %v464, 0.5
      %v470 = vmul.f32 %v458, 0.70710677
      %v471 = vmul.f32 %v460, 0.70710677
      %v472 = vmul.f32 %v462, 0.70710677
      %v473 = vmul.f32 %v464, 0.70710677
      %v474 = verf.f32.pop %v470
      %v475 = verf.f32.pop %v471
      %v476 = verf.f32.pop %v472
      %v477 = verf.f32.pop %v473
      %v478 = vadd.f32 %v474, 1.0
      %v479 = vadd.f32 %v475, 1.0
      %v480 = vadd.f32 %v476, 1.0
      %v481 = vadd.f32 %v477, 1.0
      %v482 = vmul.f32 %v466, %v478
      %v483 = vmul.f32 %v467, %v479
      %v484 = vmul.f32 %v468, %v480
      %v485 = vmul.f32 %v469, %v481
      %v486 = vld [vmem:[%s3] sm:$0xf]
      %v487 = vld [vmem:[%s3 + $0x4] sm:$0xf]
      %v488 = vld [vmem:[%s3 + $0x8] sm:$0xf]
      %v489 = vld [vmem:[%s3 + $0xc] sm:$0xf]
      %v490 = vld [vmem:[%s3 + $0x10] sm:$0xf]
      %v491 = vld [vmem:[%s3 + $0x14] sm:$0xf]
      %v492 = vld [vmem:[%s3 + $0x18] sm:$0xf]
      %v493 = vld [vmem:[%s3 + $0x1c] sm:$0xf]
      %v494 = vpack.c.bf16 %v484, %v482
      %v495 = vpack.c.bf16 %v485, %v483
      %v496 = vld [vmem:[%s4] sm:$0xff]
      %v497 = vld [vmem:[%s4 + $0x8] sm:$0xff]
      %v498 = vld [vmem:[%s4 + $0x10] sm:$0xff]
      %v499 = vld [vmem:[%s4 + $0x18] sm:$0xff]
      %v500 = vld [vmem:[%s4 + $0x20] sm:$0xff]
      %v501 = vld [vmem:[%s4 + $0x28] sm:$0xff]
      %v502 = vld [vmem:[%s4 + $0x30] sm:$0xff]
      %v503 = vld [vmem:[%s4 + $0x38] sm:$0xff]
      %505 = vset.pattern.permute.xlu0 0
      %506 = vperm.xlu0 %505, %v496
      %v507 = vpop.permute.xlu0 %506
      %510 = vset.pattern.permute.xlu0 0
      %511 = vperm.xlu0 %510, %v497
      %v512 = vpop.permute.xlu0 %511
      %515 = vset.pattern.permute.xlu0 0
      %516 = vperm.xlu0 %515, %v498
      %v517 = vpop.permute.xlu0 %516
      %520 = vset.pattern.permute.xlu0 0
      %521 = vperm.xlu0 %520, %v499
      %v522 = vpop.permute.xlu0 %521
      %525 = vset.pattern.permute.xlu0 0
      %526 = vperm.xlu0 %525, %v500
      %v527 = vpop.permute.xlu0 %526
      %530 = vset.pattern.permute.xlu0 0
      %531 = vperm.xlu0 %530, %v501
      %v532 = vpop.permute.xlu0 %531
      %535 = vset.pattern.permute.xlu0 0
      %536 = vperm.xlu0 %535, %v502
      %v537 = vpop.permute.xlu0 %536
      %540 = vset.pattern.permute.xlu0 0
      %541 = vperm.xlu0 %540, %v503
      %v542 = vpop.permute.xlu0 %541
      %v552 = vunpack.c.l.b16 %v486
      %v553 = vunpack.c.l.b16 %v487
      %v554 = vunpack.c.l.b16 %v488
      %v555 = vunpack.c.l.b16 %v489
      %v556 = vunpack.c.l.b16 %v490
      %v557 = vunpack.c.l.b16 %v491
      %v558 = vunpack.c.l.b16 %v492
      %v559 = vunpack.c.l.b16 %v493
      %v560 = vpack.c.b16 %v553, %v552
      %v561 = vpack.c.b16 %v555, %v554
      %v562 = vpack.c.b16 %v557, %v556
      %v563 = vpack.c.b16 %v559, %v558
      %vm564 = vcmask 130048
      %v566 = vsel %vm564, %v560, 0
      %v569 = vsel %vm564, %v561, 0
      %v572 = vsel %vm564, %v562, 0
      %v575 = vsel %vm564, %v563, 0
      %577 = vmatprep.subr.bf16.mxu0 %v495
      %578 = vmatpush1.bf16.msra.mxu0 %v494
      %579 = vmatprep.subr.bf16.mxu0 0
      %580 = vmatpush1.bf16.msra.mxu0 0
      %581 = vmatprep.subr.bf16.mxu0 0
      %582 = vmatpush1.bf16.msra.mxu0 0
      %583 = vmatprep.subr.bf16.mxu0 0
      %584 = vmatpush1.bf16.msra.mxu0 0
      %585 = vmatprep.subr.bf16.mxu0 0
      %586 = vmatpush1.bf16.msra.mxu0 0
      %587 = vmatprep.subr.bf16.mxu0 0
      %588 = vmatpush1.bf16.msra.mxu0 0
      %589 = vmatprep.subr.bf16.mxu0 0
      %590 = vmatpush1.bf16.msra.mxu0 0
      %591 = vmatprep.subr.bf16.mxu0 0
      %592 = vmatpush1.bf16.msra.mxu0 0
      %593 = vmatprep.subr.bf16.mxu0 0
      %594 = vmatpush1.bf16.msra.mxu0 0
      %595 = vmatprep.subr.bf16.mxu0 0
      %596 = vmatpush1.bf16.msra.mxu0 0
      %597 = vmatprep.subr.bf16.mxu0 0
      %598 = vmatpush1.bf16.msra.mxu0 0
      %599 = vmatprep.subr.bf16.mxu0 0
      %600 = vmatpush1.bf16.msra.mxu0 0
      %601 = vmatprep.subr.bf16.mxu0 0
      %602 = vmatpush1.bf16.msra.mxu0 0
      %603 = vmatprep.subr.bf16.mxu0 0
      %604 = vmatpush1.bf16.msra.mxu0 0
      %605 = vmatprep.subr.bf16.mxu0 0
      %606 = vmatpush1.bf16.msra.mxu0 0
      %607 = vmatprep.subr.bf16.mxu0 0
      %608 = vmatpush1.bf16.msra.mxu0 0
      %609 = vmatprep.mubr.bf16.mxu0 0
      %610 = vmatmul.mubr.bf16.gmra.mrb[0].mxu0 %v566
      %v611 = vpop.f32.mrb[0].mxu0
      %v612 = vadd.f32 %v507, %v611
      %v613 = vpop.f32.mrb[0].mxu0
      %v614 = vadd.f32 %v507, %v613
      %v615 = vpop.f32.mrb[0].mxu0
      %v616 = vadd.f32 %v512, %v615
      %v617 = vpop.f32.mrb[0].mxu0
      %v618 = vadd.f32 %v512, %v617
      %619 = vmatprep.mubr.bf16.mxu0 0
      %620 = vmatmul.mubr.bf16.gmra.mrb[0].mxu0 %v569
      %v621 = vpop.f32.mrb[0].mxu0
      %v622 = vadd.f32 %v517, %v621
      %v623 = vpop.f32.mrb[0].mxu0
      %v624 = vadd.f32 %v517, %v623
      %v625 = vpop.f32.mrb[0].mxu0
      %v626 = vadd.f32 %v522, %v625
      %v627 = vpop.f32.mrb[0].mxu0
      %v628 = vadd.f32 %v522, %v627
      %629 = vmatprep.mubr.bf16.mxu0 0
      %630 = vmatmul.mubr.bf16.gmra.mrb[0].mxu0 %v572
      %v631 = vpop.f32.mrb[0].mxu0
      %v632 = vadd.f32 %v527, %v631
      %v633 = vpop.f32.mrb[0].mxu0
      %v634 = vadd.f32 %v527, %v633
      %v635 = vpop.f32.mrb[0].mxu0
      %v636 = vadd.f32 %v532, %v635
      %v637 = vpop.f32.mrb[0].mxu0
      %v638 = vadd.f32 %v532, %v637
      %639 = vmatprep.mubr.bf16.mxu0 0
      %640 = vmatmul.mubr.bf16.gmra.mrb[0].mxu0 %v575
      %v641 = vpop.f32.mrb[0].mxu0
      %v642 = vadd.f32 %v537, %v641
      %v643 = vpop.f32.mrb[0].mxu0
      %v644 = vadd.f32 %v537, %v643
      %v645 = vpop.f32.mrb[0].mxu0
      %v646 = vadd.f32 %v542, %v645
      %v647 = vpop.f32.mrb[0].mxu0
      %v648 = vadd.f32 %v542, %v647
      %649 = vdwg.mxu0
      %v650 = vmul.f32 %v612, 0.5
      %v651 = vmul.f32 %v614, 0.5
      %v652 = vmul.f32 %v616, 0.5
      %v653 = vmul.f32 %v618, 0.5
      %v654 = vmul.f32 %v622, 0.5
      %v655 = vmul.f32 %v624, 0.5
      %v656 = vmul.f32 %v626, 0.5
      %v657 = vmul.f32 %v628, 0.5
      %v658 = vmul.f32 %v632, 0.5
      %v659 = vmul.f32 %v634, 0.5
      %v660 = vmul.f32 %v636, 0.5
      %v661 = vmul.f32 %v638, 0.5
      %v662 = vmul.f32 %v642, 0.5
      %v663 = vmul.f32 %v644, 0.5
      %v664 = vmul.f32 %v646, 0.5
      %v665 = vmul.f32 %v648, 0.5
      %v666 = vmul.f32 %v612, 0.70710677
      %v667 = vmul.f32 %v614, 0.70710677
      %v668 = vmul.f32 %v616, 0.70710677
      %v669 = vmul.f32 %v618, 0.70710677
      %v670 = vmul.f32 %v622, 0.70710677
      %v671 = vmul.f32 %v624, 0.70710677
      %v672 = vmul.f32 %v626, 0.70710677
      %v673 = vmul.f32 %v628, 0.70710677
      %v674 = vmul.f32 %v632, 0.70710677
      %v675 = vmul.f32 %v634, 0.70710677
      %v676 = vmul.f32 %v636, 0.70710677
      %v677 = vmul.f32 %v638, 0.70710677
      %v678 = vmul.f32 %v642, 0.70710677
      %v679 = vmul.f32 %v644, 0.70710677
      %v680 = vmul.f32 %v646, 0.70710677
      %v681 = vmul.f32 %v648, 0.70710677
      %v682 = verf.f32.pop %v666
      %v683 = verf.f32.pop %v667
      %v684 = verf.f32.pop %v668
      %v685 = verf.f32.pop %v669
      %v686 = verf.f32.pop %v670
      %v687 = verf.f32.pop %v671
      %v688 = verf.f32.pop %v672
      %v689 = verf.f32.pop %v673
      %v690 = verf.f32.pop %v674
      %v691 = verf.f32.pop %v675
      %v692 = verf.f32.pop %v676
      %v693 = verf.f32.pop %v677
      %v694 = verf.f32.pop %v678
      %v695 = verf.f32.pop %v679
      %v696 = verf.f32.pop %v680
      %v697 = verf.f32.pop %v681
      %v698 = vadd.f32 %v682, 1.0
      %v699 = vadd.f32 %v683, 1.0
      %v700 = vadd.f32 %v684, 1.0
      %v701 = vadd.f32 %v685, 1.0
      %v702 = vadd.f32 %v686, 1.0
      %v703 = vadd.f32 %v687, 1.0
      %v704 = vadd.f32 %v688, 1.0
      %v705 = vadd.f32 %v689, 1.0
      %v706 = vadd.f32 %v690, 1.0
      %v707 = vadd.f32 %v691, 1.0
      %v708 = vadd.f32 %v692, 1.0
      %v709 = vadd.f32 %v693, 1.0
      %v710 = vadd.f32 %v694, 1.0
      %v711 = vadd.f32 %v695, 1.0
      %v712 = vadd.f32 %v696, 1.0
      %v713 = vadd.f32 %v697, 1.0
      %v714 = vmul.f32 %v650, %v698
      %v715 = vmul.f32 %v651, %v699
      %v716 = vmul.f32 %v652, %v700
      %v717 = vmul.f32 %v653, %v701
      %v718 = vmul.f32 %v654, %v702
      %v719 = vmul.f32 %v655, %v703
      %v720 = vmul.f32 %v656, %v704
      %v721 = vmul.f32 %v657, %v705
      %v722 = vmul.f32 %v658, %v706
      %v723 = vmul.f32 %v659, %v707
      %v724 = vmul.f32 %v660, %v708
      %v725 = vmul.f32 %v661, %v709
      %v726 = vmul.f32 %v662, %v710
      %v727 = vmul.f32 %v663, %v711
      %v728 = vmul.f32 %v664, %v712
      %v729 = vmul.f32 %v665, %v713
      %v730 = vld [vmem:[%s5] sm:$0xf]
      %v731 = vld [vmem:[%s5 + $0x4] sm:$0xf]
      %v732 = vld [vmem:[%s5 + $0x8] sm:$0xf]
      %v733 = vld [vmem:[%s5 + $0xc] sm:$0xf]
      %v734 = vld [vmem:[%s5 + $0x10] sm:$0xf]
      %v735 = vld [vmem:[%s5 + $0x14] sm:$0xf]
      %v736 = vld [vmem:[%s5 + $0x18] sm:$0xf]
      %v737 = vld [vmem:[%s5 + $0x1c] sm:$0xf]
      %v738 = vpack.c.bf16 %v716, %v714
      %v739 = vpack.c.bf16 %v717, %v715
      %v740 = vpack.c.bf16 %v720, %v718
      %v741 = vpack.c.bf16 %v721, %v719
      %v742 = vpack.c.bf16 %v724, %v722
      %v743 = vpack.c.bf16 %v725, %v723
      %v744 = vpack.c.bf16 %v728, %v726
      %v745 = vpack.c.bf16 %v729, %v727
      %v746 = vld [vmem:[%s6] sm:$0xff]
      %v747 = vld [vmem:[%s6 + $0x8] sm:$0xff]
      %v748 = vld [vmem:[%s6 + $0x10] sm:$0xff]
      %v749 = vld [vmem:[%s6 + $0x18] sm:$0xff]
      %v750 = vld [vmem:[%s6 + $0x20] sm:$0xff]
      %v751 = vld [vmem:[%s6 + $0x28] sm:$0xff]
      %v752 = vld [vmem:[%s6 + $0x30] sm:$0xff]
      %v753 = vld [vmem:[%s6 + $0x38] sm:$0xff]
      %755 = vset.pattern.permute.xlu0 0
      %756 = vperm.xlu0 %755, %v746
      %v757 = vpop.permute.xlu0 %756
      %760 = vset.pattern.permute.xlu0 0
      %761 = vperm.xlu0 %760, %v747
      %v762 = vpop.permute.xlu0 %761
      %765 = vset.pattern.permute.xlu0 0
      %766 = vperm.xlu0 %765, %v748
      %v767 = vpop.permute.xlu0 %766
      %770 = vset.pattern.permute.xlu0 0
      %771 = vperm.xlu0 %770, %v749
      %v772 = vpop.permute.xlu0 %771
      %775 = vset.pattern.permute.xlu0 0
      %776 = vperm.xlu0 %775, %v750
      %v777 = vpop.permute.xlu0 %776
      %780 = vset.pattern.permute.xlu0 0
      %781 = vperm.xlu0 %780, %v751
      %v782 = vpop.permute.xlu0 %781
      %785 = vset.pattern.permute.xlu0 0
      %786 = vperm.xlu0 %785, %v752
      %v787 = vpop.permute.xlu0 %786
      %790 = vset.pattern.permute.xlu0 0
      %791 = vperm.xlu0 %790, %v753
      %v792 = vpop.permute.xlu0 %791
      %v802 = vunpack.c.l.b16 %v730
      %v803 = vunpack.c.l.b16 %v731
      %v804 = vunpack.c.l.b16 %v732
      %v805 = vunpack.c.l.b16 %v733
      %v806 = vunpack.c.l.b16 %v734
      %v807 = vunpack.c.l.b16 %v735
      %v808 = vunpack.c.l.b16 %v736
      %v809 = vunpack.c.l.b16 %v737
      %v810 = vpack.c.b16 %v803, %v802
      %v811 = vpack.c.b16 %v805, %v804
      %v812 = vpack.c.b16 %v807, %v806
      %v813 = vpack.c.b16 %v809, %v808
      %vm814 = vcmask 523264
      %v816 = vsel %vm814, %v810, 0
      %v819 = vsel %vm814, %v811, 0
      %v822 = vsel %vm814, %v812, 0
      %v825 = vsel %vm814, %v813, 0
      %827 = vmatprep.subr.bf16.mxu0 %v739
      %828 = vmatpush1.bf16.msra.mxu0 %v738
      %829 = vmatprep.subr.bf16.mxu0 %v741
      %830 = vmatpush1.bf16.msra.mxu0 %v740
      %831 = vmatprep.subr.bf16.mxu0 %v743
      %832 = vmatpush1.bf16.msra.mxu0 %v742
      %833 = vmatprep.subr.bf16.mxu0 %v745
      %834 = vmatpush1.bf16.msra.mxu0 %v744
      %835 = vmatprep.subr.bf16.mxu0 0
      %836 = vmatpush1.bf16.msra.mxu0 0
      %837 = vmatprep.subr.bf16.mxu0 0
      %838 = vmatpush1.bf16.msra.mxu0 0
      %839 = vmatprep.subr.bf16.mxu0 0
      %840 = vmatpush1.bf16.msra.mxu0 0
      %841 = vmatprep.subr.bf16.mxu0 0
      %842 = vmatpush1.bf16.msra.mxu0 0
      %843 = vmatprep.subr.bf16.mxu0 0
      %844 = vmatpush1.bf16.msra.mxu0 0
      %845 = vmatprep.subr.bf16.mxu0 0
      %846 = vmatpush1.bf16.msra.mxu0 0
      %847 = vmatprep.subr.bf16.mxu0 0
      %848 = vmatpush1.bf16.msra.mxu0 0
      %849 = vmatprep.subr.bf16.mxu0 0
      %850 = vmatpush1.bf16.msra.mxu0 0
      %851 = vmatprep.subr.bf16.mxu0 0
      %852 = vmatpush1.bf16.msra.mxu0 0
      %853 = vmatprep.subr.bf16.mxu0 0
      %854 = vmatpush1.bf16.msra.mxu0 0
      %855 = vmatprep.subr.bf16.mxu0 0
      %856 = vmatpush1.bf16.msra.mxu0 0
      %857 = vmatprep.subr.bf16.mxu0 0
      %858 = vmatpush1.bf16.msra.mxu0 0
      %859 = vmatprep.mubr.bf16.mxu0 0
      %860 = vmatmul.mubr.bf16.gmra.mrb[0].mxu0 %v816
      %v861 = vpop.f32.mrb[0].mxu0
      %v862 = vadd.f32 %v757, %v861
      %v863 = vpop.f32.mrb[0].mxu0
      %v864 = vadd.f32 %v757, %v863
      %v865 = vpop.f32.mrb[0].mxu0
      %v866 = vadd.f32 %v762, %v865
      %v867 = vpop.f32.mrb[0].mxu0
      %v868 = vadd.f32 %v762, %v867
      %869 = vmatprep.mubr.bf16.mxu0 0
      %870 = vmatmul.mubr.bf16.gmra.mrb[0].mxu0 %v819
      %v871 = vpop.f32.mrb[0].mxu0
      %v872 = vadd.f32 %v767, %v871
      %v873 = vpop.f32.mrb[0].mxu0
      %v874 = vadd.f32 %v767, %v873
      %v875 = vpop.f32.mrb[0].mxu0
      %v876 = vadd.f32 %v772, %v875
      %v877 = vpop.f32.mrb[0].mxu0
      %v878 = vadd.f32 %v772, %v877
      %879 = vmatprep.mubr.bf16.mxu0 0
      %880 = vmatmul.mubr.bf16.gmra.mrb[0].mxu0 %v822
      %v881 = vpop.f32.mrb[0].mxu0
      %v882 = vadd.f32 %v777, %v881
      %v883 = vpop.f32.mrb[0].mxu0
      %v884 = vadd.f32 %v777, %v883
      %v885 = vpop.f32.mrb[0].mxu0
      %v886 = vadd.f32 %v782, %v885
      %v887 = vpop.f32.mrb[0].mxu0
      %v888 = vadd.f32 %v782, %v887
      %889 = vmatprep.mubr.bf16.mxu0 0
      %890 = vmatmul.mubr.bf16.gmra.mrb[0].mxu0 %v825
      %v891 = vpop.f32.mrb[0].mxu0
      %v892 = vadd.f32 %v787, %v891
      %v893 = vpop.f32.mrb[0].mxu0
      %v894 = vadd.f32 %v787, %v893
      %v895 = vpop.f32.mrb[0].mxu0
      %v896 = vadd.f32 %v792, %v895
      %v897 = vpop.f32.mrb[0].mxu0
      %v898 = vadd.f32 %v792, %v897
      %899 = vdwg.mxu0
      %900 = vxpose.xlu0.b32.start [1/16] %v862, 128
      %901 = vxpose.xlu0.b32.cont [2/16] %v866, 128
      %902 = vxpose.xlu0.b32.cont [3/16] %v872, 128
      %903 = vxpose.xlu0.b32.cont [4/16] %v876, 128
      %904 = vxpose.xlu0.b32.cont [5/16] %v882, 128
      %905 = vxpose.xlu0.b32.cont [6/16] %v886, 128
      %906 = vxpose.xlu0.b32.cont [7/16] %v892, 128
      %907 = vxpose.xlu0.b32.cont [8/16] %v896, 128
      %908 = vxpose.xlu0.b32.cont [9/16] 0.0, 128
      %909 = vxpose.xlu0.b32.cont [10/16] 0.0, 128
      %910 = vxpose.xlu0.b32.cont [11/16] 0.0, 128
      %911 = vxpose.xlu0.b32.cont [12/16] 0.0, 128
      %912 = vxpose.xlu0.b32.cont [13/16] 0.0, 128
      %913 = vxpose.xlu0.b32.cont [14/16] 0.0, 128
      %914 = vxpose.xlu0.b32.cont [15/16] 0.0, 128
      %915 = vxpose.xlu0.b32.end [16/16] 0.0, 128
      %v916 = vpop.trf.xlu0
      %v917 = vpop.trf.xlu0
      %v918 = vpop.trf.xlu0
      %v919 = vpop.trf.xlu0
      %v920 = vpop.trf.xlu0
      %v921 = vpop.trf.xlu0
      %v922 = vpop.trf.xlu0
      %v923 = vpop.trf.xlu0
      %v924 = vpop.trf.xlu0
      %v925 = vpop.trf.xlu0
      %v926 = vpop.trf.xlu0
      %v927 = vpop.trf.xlu0
      %v928 = vpop.trf.xlu0
      %v929 = vpop.trf.xlu0
      %v930 = vpop.trf.xlu0
      %v931 = vpop.trf.xlu0
      %932 = vxpose.xlu0.b32.start [1/16] %v864, 128
      %933 = vxpose.xlu0.b32.cont [2/16] %v868, 128
      %934 = vxpose.xlu0.b32.cont [3/16] %v874, 128
      %935 = vxpose.xlu0.b32.cont [4/16] %v878, 128
      %936 = vxpose.xlu0.b32.cont [5/16] %v884, 128
      %937 = vxpose.xlu0.b32.cont [6/16] %v888, 128
      %938 = vxpose.xlu0.b32.cont [7/16] %v894, 128
      %939 = vxpose.xlu0.b32.cont [8/16] %v898, 128
      %940 = vxpose.xlu0.b32.cont [9/16] 0.0, 128
      %941 = vxpose.xlu0.b32.cont [10/16] 0.0, 128
      %942 = vxpose.xlu0.b32.cont [11/16] 0.0, 128
      %943 = vxpose.xlu0.b32.cont [12/16] 0.0, 128
      %944 = vxpose.xlu0.b32.cont [13/16] 0.0, 128
      %945 = vxpose.xlu0.b32.cont [14/16] 0.0, 128
      %946 = vxpose.xlu0.b32.cont [15/16] 0.0, 128
      %947 = vxpose.xlu0.b32.end [16/16] 0.0, 128
      %v948 = vpop.trf.xlu0
      %v949 = vpop.trf.xlu0
      %v950 = vpop.trf.xlu0
      %v951 = vpop.trf.xlu0
      %v952 = vpop.trf.xlu0
      %v953 = vpop.trf.xlu0
      %v954 = vpop.trf.xlu0
      %v955 = vpop.trf.xlu0
      %v956 = vpop.trf.xlu0
      %v957 = vpop.trf.xlu0
      %v958 = vpop.trf.xlu0
      %v959 = vpop.trf.xlu0
      %v960 = vpop.trf.xlu0
      %v961 = vpop.trf.xlu0
      %v962 = vpop.trf.xlu0
      %v963 = vpop.trf.xlu0
      %v964 = vpack.c.bf16 %v917, %v916
      %v965 = vpack.c.bf16 %v919, %v918
      %v966 = vpack.c.bf16 %v921, %v920
      %v967 = vpack.c.bf16 %v923, %v922
      %v968 = vpack.c.bf16 %v925, %v924
      %v969 = vpack.c.bf16 %v927, %v926
      %v970 = vpack.c.bf16 %v929, %v928
      %v971 = vpack.c.bf16 %v931, %v930
      %v972 = vpack.c.bf16 %v949, %v948
      %v973 = vpack.c.bf16 %v951, %v950
      %v974 = vpack.c.bf16 %v953, %v952
      %v975 = vpack.c.bf16 %v955, %v954
      %v976 = vpack.c.bf16 %v957, %v956
      %v977 = vpack.c.bf16 %v959, %v958
      %v978 = vpack.c.bf16 %v961, %v960
      %v979 = vpack.c.bf16 %v963, %v962
      %v996 = vunpack.c.l.b16 %v964
      %v997 = vunpack.c.h.b16 %v964
      %v998 = vunpack.c.l.b16 %v965
      %v999 = vunpack.c.h.b16 %v965
      %v1000 = vunpack.c.l.b16 %v966
      %v1001 = vunpack.c.h.b16 %v966
      %v1002 = vunpack.c.l.b16 %v967
      %v1003 = vunpack.c.h.b16 %v967
      %v1004 = vunpack.c.l.b16 %v968
      %v1005 = vunpack.c.h.b16 %v968
      %v1006 = vunpack.c.l.b16 %v969
      %v1007 = vunpack.c.h.b16 %v969
      %v1008 = vunpack.c.l.b16 %v970
      %v1009 = vunpack.c.h.b16 %v970
      %v1010 = vunpack.c.l.b16 %v971
      %v1011 = vunpack.c.h.b16 %v971
      %v1012 = vunpack.c.l.b16 %v972
      %v1013 = vunpack.c.h.b16 %v972
      %v1014 = vunpack.c.l.b16 %v973
      %v1015 = vunpack.c.h.b16 %v973
      %v1016 = vunpack.c.l.b16 %v974
      %v1017 = vunpack.c.h.b16 %v974
      %v1018 = vunpack.c.l.b16 %v975
      %v1019 = vunpack.c.h.b16 %v975
      %v1020 = vunpack.c.l.b16 %v976
      %v1021 = vunpack.c.h.b16 %v976
      %v1022 = vunpack.c.l.b16 %v977
      %v1023 = vunpack.c.h.b16 %v977
      %v1024 = vunpack.c.l.b16 %v978
      %v1025 = vunpack.c.h.b16 %v978
      %v1026 = vunpack.c.l.b16 %v979
      %v1027 = vunpack.c.h.b16 %v979
      %v1028 = vpack.c.b16 %v996, %v996
      %v1029 = vpack.c.b16 %v997, %v997
      %v1030 = vpack.c.b16 %v998, %v998
      %v1031 = vpack.c.b16 %v999, %v999
      %v1032 = vpack.c.b16 %v1000, %v1000
      %v1033 = vpack.c.b16 %v1001, %v1001
      %v1034 = vpack.c.b16 %v1002, %v1002
      %v1035 = vpack.c.b16 %v1003, %v1003
      %v1036 = vpack.c.b16 %v1004, %v1004
      %v1037 = vpack.c.b16 %v1005, %v1005
      %v1038 = vpack.c.b16 %v1006, %v1006
      %v1039 = vpack.c.b16 %v1007, %v1007
      %v1040 = vpack.c.b16 %v1008, %v1008
      %v1041 = vpack.c.b16 %v1009, %v1009
      %v1042 = vpack.c.b16 %v1010, %v1010
      %v1043 = vpack.c.b16 %v1011, %v1011
      %v1044 = vpack.c.b16 %v1012, %v1012
      %v1045 = vpack.c.b16 %v1013, %v1013
      %v1046 = vpack.c.b16 %v1014, %v1014
      %v1047 = vpack.c.b16 %v1015, %v1015
      %v1048 = vpack.c.b16 %v1016, %v1016
      %v1049 = vpack.c.b16 %v1017, %v1017
      %v1050 = vpack.c.b16 %v1018, %v1018
      %v1051 = vpack.c.b16 %v1019, %v1019
      %v1052 = vpack.c.b16 %v1020, %v1020
      %v1053 = vpack.c.b16 %v1021, %v1021
      %v1054 = vpack.c.b16 %v1022, %v1022
      %v1055 = vpack.c.b16 %v1023, %v1023
      %v1056 = vpack.c.b16 %v1024, %v1024
      %v1057 = vpack.c.b16 %v1025, %v1025
      %v1058 = vpack.c.b16 %v1026, %v1026
      %v1059 = vpack.c.b16 %v1027, %v1027
      %vm1092 = vcmask 519168
      %1093 = vst.msk [vmem:[%s316] sm:$0xf] %vm1092, %v1028
      %1094 = vst.msk [vmem:[%s316 + $0x4] sm:$0xf] %vm1092, %v1029
      %1095 = vst.msk [vmem:[%s316 + $0x8] sm:$0xf] %vm1092, %v1030
      %1096 = vst.msk [vmem:[%s316 + $0xc] sm:$0xf] %vm1092, %v1031
      %1097 = vst.msk [vmem:[%s316 + $0x10] sm:$0xf] %vm1092, %v1032
      %1098 = vst.msk [vmem:[%s316 + $0x14] sm:$0xf] %vm1092, %v1033
      %1099 = vst.msk [vmem:[%s316 + $0x18] sm:$0xf] %vm1092, %v1034
      %1100 = vst.msk [vmem:[%s316 + $0x1c] sm:$0xf] %vm1092, %v1035
      %1101 = vst.msk [vmem:[%s316 + $0x20] sm:$0xf] %vm1092, %v1036
      %1102 = vst.msk [vmem:[%s316 + $0x24] sm:$0xf] %vm1092, %v1037
      %1103 = vst.msk [vmem:[%s316 + $0x28] sm:$0xf] %vm1092, %v1038
      %1104 = vst.msk [vmem:[%s316 + $0x2c] sm:$0xf] %vm1092, %v1039
      %1105 = vst.msk [vmem:[%s316 + $0x30] sm:$0xf] %vm1092, %v1040
      %1106 = vst.msk [vmem:[%s316 + $0x34] sm:$0xf] %vm1092, %v1041
      %1107 = vst.msk [vmem:[%s316 + $0x38] sm:$0xf] %vm1092, %v1042
      %1108 = vst.msk [vmem:[%s316 + $0x3c] sm:$0xf] %vm1092, %v1043
      %1109 = vst.msk [vmem:[%s316 + $0x40] sm:$0xf] %vm1092, %v1044
      %1110 = vst.msk [vmem:[%s316 + $0x44] sm:$0xf] %vm1092, %v1045
      %1111 = vst.msk [vmem:[%s316 + $0x48] sm:$0xf] %vm1092, %v1046
      %1112 = vst.msk [vmem:[%s316 + $0x4c] sm:$0xf] %vm1092, %v1047
      %1113 = vst.msk [vmem:[%s316 + $0x50] sm:$0xf] %vm1092, %v1048
      %1114 = vst.msk [vmem:[%s316 + $0x54] sm:$0xf] %vm1092, %v1049
      %1115 = vst.msk [vmem:[%s316 + $0x58] sm:$0xf] %vm1092, %v1050
      %1116 = vst.msk [vmem:[%s316 + $0x5c] sm:$0xf] %vm1092, %v1051
      %1117 = vst.msk [vmem:[%s316 + $0x60] sm:$0xf] %vm1092, %v1052
      %1118 = vst.msk [vmem:[%s316 + $0x64] sm:$0xf] %vm1092, %v1053
      %1119 = vst.msk [vmem:[%s316 + $0x68] sm:$0xf] %vm1092, %v1054
      %1120 = vst.msk [vmem:[%s316 + $0x6c] sm:$0xf] %vm1092, %v1055
      %1121 = vst.msk [vmem:[%s316 + $0x70] sm:$0xf] %vm1092, %v1056
      %1122 = vst.msk [vmem:[%s316 + $0x74] sm:$0xf] %vm1092, %v1057
      %1123 = vst.msk [vmem:[%s316 + $0x78] sm:$0xf] %vm1092, %v1058
      %1124 = vst.msk [vmem:[%s316 + $0x7c] sm:$0xf] %vm1092, %v1059
      %s1125 = smul.u32 32, %s23
      %p1126 = scmp.lt.s32.totalorder %s22, 1
      %s1127 = scalar_select %p1126, %s22, 1
      %p1128 = scmp.lt.s32.totalorder %s1125, 31
      %s1129 = scalar_select %p1128, %s1125, 31
      %s1130 = smul.addr %s1127, 32
      %s1131 = sadd.s32 %s1129, %s1130
      %s1132 = smul.addr %s1131, 4
      %s1133 = scalar_lea.vmem %s7, %s1132
      // Predicated region
      $region49: #{tpu_custom_call.1} parent=47 // pred_check
        %p1134 = pneg %p204
      $region50: #{tpu_custom_call.1} parent=47 // pred_check_branch
        %1136 = sbr.rel (%p1134) target = $region52
      $region51: #{tpu_custom_call.1} parent=47 // pred_region
        %s1137 = smul.u32 32, %s23
      $region52: #{tpu_custom_call.1} parent=47 // pred_fallthru
        _
    $region48: #{tpu_custom_call.1} parent=5 // pred_fallthru
      _
    %p1138 = scmp.le.s32.totalorder 2, %s13
    // Predicated region
    $region53: #{tpu_custom_call.1} parent=5 // pred_check
      %p1139 = pneg %p1138
    $region54: #{tpu_custom_call.1} parent=5 // pred_check_branch
      %1141 = sbr.rel (%p1139) target = $region56
    $region55: #{tpu_custom_call.1} parent=5 // pred_region
      %s1142 = ssub.s32 %s13, 2
      // Predicated region
      $region57: #{tpu_custom_call.1} parent=55 // pred_check
        %p1143 = pneg %p210
      $region58: #{tpu_custom_call.1} parent=55 // pred_check_branch
        %1145 = sbr.rel (%p1143) target = $region60
      $region59: #{tpu_custom_call.1} parent=55 // pred_region
        %s1146 = smul.u32 32, %s25
        %p1147 = scmp.lt.s32.totalorder %s24, 1
        %s1148 = scalar_select %p1147, %s24, 1
        %p1149 = scmp.lt.s32.totalorder %s1146, 31
        %s1150 = scalar_select %p1149, %s1146, 31
        %s1151 = smul.addr %s1148, 32
        %s1152 = sadd.s32 %s1150, %s1151
        %s1153 = smul.addr %s1152, 4
        %s1154 = scalar_lea.vmem %s7, %s1153
      $region60: #{tpu_custom_call.1} parent=55 // pred_fallthru
        _
    $region56: #{tpu_custom_call.1} parent=5 // pred_fallthru
      _
  $region6: #{tpu_custom_call.1} parent=0 // loop_footer
    %s17 = sadd.s32 1, %s13
  $region7: #{tpu_custom_call.1} parent=0 // loop_footer_branch
    %12 = sbr.rel target = $region3
  $region8: #{tpu_custom_call.1} parent=0 // loop_exit
    _

</llo_original>
